<compile_context>
chip_gen: v6e
topology: v6e:2x2x1
jax: 0.10.0
libtpu: 0.0.40
codegen_flags: <defaults>
</compile_context>

<pallas_src>
import functools

import numpy as np
import jax
import jax.numpy as jnp
from jax.experimental import pallas as pl
from jax.experimental.pallas import tpu as pltpu


def _round_up(x, m):
    return ((x + m - 1) // m) * m


@functools.lru_cache(maxsize=None)
def _dft_bases(n, k8, dtype):
    """rfft-style DFT bases, cached per (N, padded-K, dtype).

    Returns (fcos, fsin, icos, isin):
      fcos (n, k8) =  cos(2*pi*k*t/N)          -> x @ fcos = Re X[k]
      fsin (n, k8) = -sin(2*pi*k*t/N)          -> x @ fsin = Im X[k]
      icos (k8, n) =  (w_k/N) * cos(2*pi*k*t/N)
      isin (k8, n) = -(w_k/N) * sin(2*pi*k*t/N)
    with Hermitian weights w_k in {1, 2} (w_0 = 1, Nyquist = 1 for even N) and
    the 1/N inverse-FFT scale folded in.  Columns/rows [K:k8) are zero-padded.
    Built in float64 numpy for accurate trig, then cast to `dtype`.
    """
    k = n // 2 + 1                                      # rfft bin count
    t = np.arange(n, dtype=np.float64)
    freqs = np.arange(k, dtype=np.float64)
    ang = (2.0 * np.pi / n) * np.outer(t, freqs)        # (n, K)
    cos = np.cos(ang)
    sin = np.sin(ang)

    fcos = np.zeros((n, k8), dtype=np.float64)
    fsin = np.zeros((n, k8), dtype=np.float64)
    fcos[:, :k] = cos
    fsin[:, :k] = -sin

    w = np.full((k,), 2.0)
    w[0] = 1.0
    if n % 2 == 0:
        w[-1] = 1.0                                     # Nyquist bin
    icos = np.zeros((k8, n), dtype=np.float64)
    isin = np.zeros((k8, n), dtype=np.float64)
    icos[:k, :] = (w[:, None] / n) * cos.T
    isin[:k, :] = -(w[:, None] / n) * sin.T

    return (jnp.asarray(fcos, dtype=dtype), jnp.asarray(fsin, dtype=dtype),
            jnp.asarray(icos, dtype=dtype), jnp.asarray(isin, dtype=dtype))


def _anr_kernel(x_ref, fcos_ref, fsin_ref, icos_ref, isin_ref, o_ref, *,
                coef2, inv_n, inv_nm1):
    x = x_ref[...].astype(jnp.float32)                  # (TR, N) f32

    # Forward real DFT: two MXU matmuls against (N, K8) trig bases.
    xm = x.astype(fcos_ref.dtype)
    xr = jnp.dot(xm, fcos_ref[...], preferred_element_type=jnp.float32)
    xi = jnp.dot(xm, fsin_ref[...], preferred_element_type=jnp.float32)

    # Unbiased (ddof=1) variance along lanes, mean-centered two-pass in f32
    # (robust to DC-heavy IQ data).  thr_sq == (threshold*std/num_channels)^2.
    mean = jnp.sum(x, axis=-1, keepdims=True) * inv_n
    d = x - mean
    var = jnp.sum(d * d, axis=-1, keepdims=True) * inv_nm1
    thr_sq = coef2 * var                                # (TR, 1)

    # Squared-magnitude thresholding (== |X| > thr for thr >= 0); the zero
    # padded bins [K:k8) have xr = xi = 0 and zero inverse-basis rows, so they
    # never contribute regardless of the comparison outcome.
    keep = (xr * xr + xi * xi) > thr_sq
    xr = jnp.where(keep, xr, 0.0)
    xi = jnp.where(keep, xi, 0.0)

    # Inverse real DFT via Hermitian reconstruction (weights & 1/N folded into
    # the bases): two MXU matmuls summed in f32.
    out = jnp.dot(xr.astype(icos_ref.dtype), icos_ref[...],
                  preferred_element_type=jnp.float32)
    out = out + jnp.dot(xi.astype(isin_ref.dtype), isin_ref[...],
                        preferred_element_type=jnp.float32)
    o_ref[...] = out.astype(o_ref.dtype)


def adaptive_noise_reduction(iq_data, *, threshold=0.05, num_channels=4,
                             row_tile=256, matmul_dtype=jnp.bfloat16):
    """iq_data: (B, C, N) float32. Returns denoised (B, C, N) float32."""
    b, c, n = iq_data.shape
    rows = b * c
    x2d = iq_data.reshape(rows, n).astype(jnp.float32)

    # Row tiling: fill the 256-row MXU on real workloads, shrink for tiny
    # inputs, and (when possible) keep >= 2 grid steps so the "parallel" row
    # axis can shard across 2 TensorCores on v7x.
    rows8 = _round_up(rows, 8)
    tile_req = max(8, _round_up(int(row_tile), 8))
    if rows8 > tile_req:
        tile = tile_req
    elif rows8 >= 16:
        tile = _round_up(-(-rows8 // 2), 8)             # ~2 grid steps
    else:
        tile = rows8
    total_rows = _round_up(rows8, tile)
    if total_rows != rows:
        x2d = jnp.concatenate(
            [x2d, jnp.zeros((total_rows - rows, n), jnp.float32)], axis=0)

    # rfft bin count, padded only to a sublane multiple (8).
    k = n // 2 + 1
    k8 = _round_up(k, 8)
    mm_dtype = np.dtype(matmul_dtype)
    fcos, fsin, icos, isin = _dft_bases(n, k8, mm_dtype)

    coef = float(threshold) / float(num_channels)
    coef2 = max(coef, 0.0) ** 2        # guard thr<0: mag>neg is always true
    inv_n = 1.0 / n
    inv_nm1 = 1.0 / (n - 1) if n > 1 else float("nan")  # n=1 -> NaN (as torch)

    kernel = functools.partial(_anr_kernel, coef2=coef2,
                               inv_n=inv_n, inv_nm1=inv_nm1)

    # Scoped-VMEM budget: bases single-buffered, x/out tiles double-buffered,
    # plus headroom for intermediates / spills.
    basis_bytes = 4 * n * k8 * mm_dtype.itemsize
    io_bytes = 2 * 2 * (tile * n * 4)
    vmem_limit = min(int((basis_bytes + io_bytes) * 1.5) + (8 << 20), 128 << 20)

    def basis_spec(shape):
        # Constant block across the grid -> single buffer (no double-buffer).
        return pl.BlockSpec(shape, lambda i: (0, 0),
                            pipeline_mode=pl.Buffered(1))

    out2d = pl.pallas_call(
        kernel,
        out_shape=jax.ShapeDtypeStruct((total_rows, n), jnp.float32),
        grid_spec=pltpu.PrefetchScalarGridSpec(
            num_scalar_prefetch=0,
            grid=(total_rows // tile,),
            in_specs=[
                pl.BlockSpec((tile, n), lambda i: (i, 0)),   # x row tile
                basis_spec((n, k8)),                         # fwd cos
                basis_spec((n, k8)),                         # fwd -sin
                basis_spec((k8, n)),                         # inv cos
                basis_spec((k8, n)),                         # inv -sin
            ],
            out_specs=pl.BlockSpec((tile, n), lambda i: (i, 0)),
        ),
        compiler_params=pltpu.CompilerParams(
            dimension_semantics=("parallel",),
            vmem_limit_bytes=vmem_limit),
    )(x2d, fcos, fsin, icos, isin)

    return out2d[:rows].reshape(b, c, n)


def _reference(iq_data, threshold=0.05, num_channels=4):
    """Pure-JAX reference mirroring the PyTorch forward."""
    noise = jnp.std(iq_data, axis=-1, keepdims=True, ddof=1)
    x_fft = jnp.fft.fft(iq_data.astype(jnp.float32), axis=-1)
    mag = jnp.abs(x_fft)
    thr = threshold * noise * (1.0 / num_channels)
    x_fft_d = jnp.where(mag > thr, x_fft, 0.0 + 0.0j)
    return jnp.real(jnp.fft.ifft(x_fft_d, axis=-1)).astype(jnp.float32)


if __name__ == "__main__":
    key = jax.random.PRNGKey(0)
    B, C, N = 2, 4, 128               # batch=2, channels=4, seq=128
    iq = jax.random.normal(key, (B, C, N), dtype=jnp.float32)

    ref = _reference(iq, threshold=0.05, num_channels=C)

    # Default path: bf16 MXU matmuls, f32 accumulation + f32 elementwise math.
    # Near-threshold bins may flip keep/drop under bf16 rounding (accepted
    # accuracy trade), hence the looser tolerance.
    out = adaptive_noise_reduction(iq, threshold=0.05, num_channels=C)
    out = jax.block_until_ready(out)
    assert out.shape == (B, C, N)
    err_bf16 = float(jnp.max(jnp.abs(out - ref)))
    assert err_bf16 < 1e-1, f"bf16 path mismatch vs reference: {err_bf16}"

    # Exact f32-basis path.
    out_f32 = adaptive_noise_reduction(iq, threshold=0.05, num_channels=C,
                                       matmul_dtype=jnp.float32)
    out_f32 = jax.block_until_ready(out_f32)
    err_f32 = float(jnp.max(jnp.abs(out_f32 - ref)))
    assert err_f32 < 2e-3, f"f32 path mismatch vs reference: {err_f32}"

    print("KERNEL_OK")
</pallas_src>

<mosaic_0001>
module attributes {stable_mosaic.version = 11 : i64} {
  func.func @_anr_kernel(%arg0: i32, %arg1: memref<8x128xf32, #tpu.memory_space<vmem>>, %arg2: memref<128x72xbf16, #tpu.memory_space<vmem>>, %arg3: memref<128x72xbf16, #tpu.memory_space<vmem>>, %arg4: memref<72x128xbf16, #tpu.memory_space<vmem>>, %arg5: memref<72x128xbf16, #tpu.memory_space<vmem>>, %arg6: memref<8x128xf32, #tpu.memory_space<vmem>>) attributes {dimension_semantics = [#tpu.dimension_semantics<parallel>], iteration_bounds = array<i64: 1>, scalar_prefetch = 0 : i64, scratch_operands = 0 : i64, tpu.core_type = #tpu.core_type<tc>, window_params = [{transform_indices = @transform_0, window_bounds = array<i64: 8, 128>}, {pipeline_mode = #tpu.pipeline_mode<synchronous>, transform_indices = @transform_1, window_bounds = array<i64: 128, 72>}, {pipeline_mode = #tpu.pipeline_mode<synchronous>, transform_indices = @transform_2, window_bounds = array<i64: 128, 72>}, {pipeline_mode = #tpu.pipeline_mode<synchronous>, transform_indices = @transform_3, window_bounds = array<i64: 72, 128>}, {pipeline_mode = #tpu.pipeline_mode<synchronous>, transform_indices = @transform_4, window_bounds = array<i64: 72, 128>}, {transform_indices = @transform_5, window_bounds = array<i64: 8, 128>}]} {
    %c0 = arith.constant 0 : index
    %c0_0 = arith.constant 0 : index
    %0 = vector.load %arg1[%c0, %c0_0] : memref<8x128xf32, #tpu.memory_space<vmem>>, vector<8x128xf32>
    %1 = arith.truncf %0 : vector<8x128xf32> to vector<8x128xbf16>
    %c0_1 = arith.constant 0 : index
    %c0_2 = arith.constant 0 : index
    %2 = vector.load %arg2[%c0_1, %c0_2] : memref<128x72xbf16, #tpu.memory_space<vmem>>, vector<128x72xbf16>
    %cst = arith.constant dense<0.000000e+00> : vector<8x72xf32>
    %3 = tpu.matmul %1, %2, %cst {dimension_numbers = #tpu.dot_dimension_numbers<[1], [0], [0], [1], [0, 0, 1, 1], [], []>} : vector<8x128xbf16>, vector<128x72xbf16>, vector<8x72xf32> -> vector<8x72xf32>
    %c0_3 = arith.constant 0 : index
    %c0_4 = arith.constant 0 : index
    %4 = vector.load %arg3[%c0_3, %c0_4] : memref<128x72xbf16, #tpu.memory_space<vmem>>, vector<128x72xbf16>
    %cst_5 = arith.constant dense<0.000000e+00> : vector<8x72xf32>
    %5 = tpu.matmul %1, %4, %cst_5 {dimension_numbers = #tpu.dot_dimension_numbers<[1], [0], [0], [1], [0, 0, 1, 1], [], []>} : vector<8x128xbf16>, vector<128x72xbf16>, vector<8x72xf32> -> vector<8x72xf32>
    %cst_6 = arith.constant dense<0.000000e+00> : vector<8xf32>
    %6 = vector.multi_reduction <add>, %0, %cst_6 [1] : vector<8x128xf32> to vector<8xf32>
    %7 = vector.shape_cast %6 : vector<8xf32> to vector<8x1xf32>
    %cst_7 = arith.constant 7.812500e-03 : f32
    %8 = vector.broadcast %cst_7 : f32 to vector<8x1xf32>
    %9 = arith.mulf %7, %8 : vector<8x1xf32>
    %10 = vector.broadcast %9 : vector<8x1xf32> to vector<8x128xf32>
    %11 = arith.subf %0, %10 : vector<8x128xf32>
    %12 = arith.mulf %11, %11 : vector<8x128xf32>
    %cst_8 = arith.constant dense<0.000000e+00> : vector<8xf32>
    %13 = vector.multi_reduction <add>, %12, %cst_8 [1] : vector<8x128xf32> to vector<8xf32>
    %14 = vector.shape_cast %13 : vector<8xf32> to vector<8x1xf32>
    %cst_9 = arith.constant 0.00787401571 : f32
    %15 = vector.broadcast %cst_9 : f32 to vector<8x1xf32>
    %16 = arith.mulf %14, %15 : vector<8x1xf32>
    %cst_10 = arith.constant 1.562500e-04 : f32
    %17 = vector.broadcast %cst_10 : f32 to vector<8x1xf32>
    %18 = arith.mulf %17, %16 : vector<8x1xf32>
    %19 = arith.mulf %3, %3 : vector<8x72xf32>
    %20 = arith.mulf %5, %5 : vector<8x72xf32>
    %21 = arith.addf %19, %20 : vector<8x72xf32>
    %22 = vector.broadcast %18 : vector<8x1xf32> to vector<8x72xf32>
    %23 = arith.cmpf ogt, %21, %22 : vector<8x72xf32>
    %cst_11 = arith.constant 0.000000e+00 : f32
    %24 = vector.broadcast %cst_11 : f32 to vector<8x72xf32>
    %25 = arith.select %23, %3, %24 : vector<8x72xi1>, vector<8x72xf32>
    %cst_12 = arith.constant 0.000000e+00 : f32
    %26 = vector.broadcast %cst_12 : f32 to vector<8x72xf32>
    %27 = arith.select %23, %5, %26 : vector<8x72xi1>, vector<8x72xf32>
    %28 = arith.truncf %25 : vector<8x72xf32> to vector<8x72xbf16>
    %c0_13 = arith.constant 0 : index
    %c0_14 = arith.constant 0 : index
    %29 = vector.load %arg4[%c0_13, %c0_14] : memref<72x128xbf16, #tpu.memory_space<vmem>>, vector<72x128xbf16>
    %cst_15 = arith.constant dense<0.000000e+00> : vector<8x128xf32>
    %30 = tpu.matmul %28, %29, %cst_15 {dimension_numbers = #tpu.dot_dimension_numbers<[1], [0], [0], [1], [0, 0, 1, 1], [], []>} : vector<8x72xbf16>, vector<72x128xbf16>, vector<8x128xf32> -> vector<8x128xf32>
    %31 = arith.truncf %27 : vector<8x72xf32> to vector<8x72xbf16>
    %c0_16 = arith.constant 0 : index
    %c0_17 = arith.constant 0 : index
    %32 = vector.load %arg5[%c0_16, %c0_17] : memref<72x128xbf16, #tpu.memory_space<vmem>>, vector<72x128xbf16>
    %cst_18 = arith.constant dense<0.000000e+00> : vector<8x128xf32>
    %33 = tpu.matmul %31, %32, %cst_18 {dimension_numbers = #tpu.dot_dimension_numbers<[1], [0], [0], [1], [0, 0, 1, 1], [], []>} : vector<8x72xbf16>, vector<72x128xbf16>, vector<8x128xf32> -> vector<8x128xf32>
    %34 = arith.addf %30, %33 : vector<8x128xf32>
    %c0_19 = arith.constant 0 : index
    %c0_20 = arith.constant 0 : index
    %35 = vector.load %arg6[%c0_19, %c0_20] : memref<8x128xf32, #tpu.memory_space<vmem>>, vector<8x128xf32>
    tpu.vector_store %arg6[%c0_19, %c0_20], %34 {strides = array<i32>} : memref<8x128xf32, #tpu.memory_space<vmem>>, vector<8x128xf32>,
    return
  }
  func.func @transform_0(%arg0: i32) -> (i32, i32) {
    %c0_i32 = arith.constant 0 : i32
    %c0_i32_0 = arith.constant 0 : i32
    return %arg0, %c0_i32 : i32, i32
  }
  func.func @transform_1(%arg0: i32) -> (i32, i32) {
    %c0_i32 = arith.constant 0 : i32
    %c0_i32_0 = arith.constant 0 : i32
    %c0_i32_1 = arith.constant 0 : i32
    return %c0_i32, %c0_i32_0 : i32, i32
  }
  func.func @transform_2(%arg0: i32) -> (i32, i32) {
    %c0_i32 = arith.constant 0 : i32
    %c0_i32_0 = arith.constant 0 : i32
    %c0_i32_1 = arith.constant 0 : i32
    return %c0_i32, %c0_i32_0 : i32, i32
  }
  func.func @transform_3(%arg0: i32) -> (i32, i32) {
    %c0_i32 = arith.constant 0 : i32
    %c0_i32_0 = arith.constant 0 : i32
    %c0_i32_1 = arith.constant 0 : i32
    return %c0_i32, %c0_i32_0 : i32, i32
  }
  func.func @transform_4(%arg0: i32) -> (i32, i32) {
    %c0_i32 = arith.constant 0 : i32
    %c0_i32_0 = arith.constant 0 : i32
    %c0_i32_1 = arith.constant 0 : i32
    return %c0_i32, %c0_i32_0 : i32, i32
  }
  func.func @transform_5(%arg0: i32) -> (i32, i32) {
    %c0_i32 = arith.constant 0 : i32
    %c0_i32_0 = arith.constant 0 : i32
    return %arg0, %c0_i32 : i32, i32
  }
}

</mosaic_0001>

<llo_original>
// kernel: tpu_custom_call.1
$region0: #{tpu_custom_call.1}
  #allocation0 [shape = 'u32[]', space=smem, size = 0x4, offset = 0x4, fixed_abs, tag = 'smem constant byte address 0x4 - core index']
  #allocation1 [shape = 'u32[144,128]{1,0:T(1,128)}', space=vmem, size = 0x12000, scoped, tag = 'internal scratch']
  %s0 = inlined_call_operand.vmem [shape: f32[8,128], index: 0, kind: input, shape index: {}]
  %s1 = inlined_call_operand.vmem [shape: bf16[128,72], index: 1, kind: input, shape index: {}]
  %s2 = inlined_call_operand.vmem [shape: bf16[128,72], index: 2, kind: input, shape index: {}]
  %s3 = inlined_call_operand.vmem [shape: bf16[72,128], index: 3, kind: input, shape index: {}]
  %s4 = inlined_call_operand.vmem [shape: bf16[72,128], index: 4, kind: input, shape index: {}]
  %s5 = inlined_call_operand.hbm [shape: f32[8,128], index: 5, kind: output, shape index: {}]
  %s6 = sld [smem:[#allocation0]]
  $region30: #{tpu_custom_call.1} parent=0
    _
  %s8 = ssub.s32 1, %s6
  %s9 = scalar_select 0, %s8, %s6
  $region1: #{tpu_custom_call.1} parent=0
    #allocation2 [shape = 'u8[4096]{0}', space=vmem, size = 0x1000, scoped, tag = 'output window, operand 0, single buffered']
    #allocation3 [shape = 's32[1]{0}', space=sflag, size = 0x4, scoped, tag = 'scoped memory for tpu_custom_call.1']
    %10 = vsyncpa [#allocation3], 0
    // Predicated region
    $region2: #{tpu_custom_call.1} parent=1 // pred_check
      _
    $region3: #{tpu_custom_call.1} parent=1 // pred_check_branch
      %12 = sbr.rel (0) target = $region5
    $region4: #{tpu_custom_call.1} parent=1 // pred_region
      _
    $region5: #{tpu_custom_call.1} parent=1 // pred_fallthru
      _
    // Predicated region
    $region6: #{tpu_custom_call.1} parent=1 // pred_check
      _
    $region7: #{tpu_custom_call.1} parent=1 // pred_check_branch
      %14 = sbr.rel (0) target = $region9
    $region8: #{tpu_custom_call.1} parent=1 // pred_region
      _
    $region9: #{tpu_custom_call.1} parent=1 // pred_fallthru
      _
    // Predicated region
    $region10: #{tpu_custom_call.1} parent=1 // pred_check
      _
    $region11: #{tpu_custom_call.1} parent=1 // pred_check_branch
      %16 = sbr.rel (0) target = $region13
    $region12: #{tpu_custom_call.1} parent=1 // pred_region
      _
    $region13: #{tpu_custom_call.1} parent=1 // pred_fallthru
      _
    // Predicated region
    $region14: #{tpu_custom_call.1} parent=1 // pred_check
      _
    $region15: #{tpu_custom_call.1} parent=1 // pred_check_branch
      %18 = sbr.rel (0) target = $region17
    $region16: #{tpu_custom_call.1} parent=1 // pred_region
      _
    $region17: #{tpu_custom_call.1} parent=1 // pred_fallthru
      _
    // Predicated region
    $region18: #{tpu_custom_call.1} parent=1 // pred_check
      _
    $region19: #{tpu_custom_call.1} parent=1 // pred_check_branch
      %20 = sbr.rel (0) target = $region21
    $region20: #{tpu_custom_call.1} parent=1 // pred_region
      _
    $region21: #{tpu_custom_call.1} parent=1 // pred_fallthru
      _
    %v22 = vld [vmem:[%s0] sm:$0xff]
    %v23 = vpack.c.bf16 %v22, %v22
    %v24 = vld [vmem:[%s1] sm:$0xf]
    %v25 = vld [vmem:[%s1 + $0x4] sm:$0xf]
    %v26 = vld [vmem:[%s1 + $0x8] sm:$0xf]
    %v27 = vld [vmem:[%s1 + $0xc] sm:$0xf]
    %v28 = vld [vmem:[%s1 + $0x10] sm:$0xf]
    %v29 = vld [vmem:[%s1 + $0x14] sm:$0xf]
    %v30 = vld [vmem:[%s1 + $0x18] sm:$0xf]
    %v31 = vld [vmem:[%s1 + $0x1c] sm:$0xf]
    %v32 = vld [vmem:[%s1 + $0x20] sm:$0xf]
    %v33 = vld [vmem:[%s1 + $0x24] sm:$0xf]
    %v34 = vld [vmem:[%s1 + $0x28] sm:$0xf]
    %v35 = vld [vmem:[%s1 + $0x2c] sm:$0xf]
    %v36 = vld [vmem:[%s1 + $0x30] sm:$0xf]
    %v37 = vld [vmem:[%s1 + $0x34] sm:$0xf]
    %v38 = vld [vmem:[%s1 + $0x38] sm:$0xf]
    %v39 = vld [vmem:[%s1 + $0x3c] sm:$0xf]
    %v56 = vunpack.c.l.b16 %v24
    %v57 = vunpack.c.l.b16 %v25
    %v58 = vunpack.c.l.b16 %v26
    %v59 = vunpack.c.l.b16 %v27
    %v60 = vunpack.c.l.b16 %v28
    %v61 = vunpack.c.l.b16 %v29
    %v62 = vunpack.c.l.b16 %v30
    %v63 = vunpack.c.l.b16 %v31
    %v64 = vunpack.c.l.b16 %v32
    %v65 = vunpack.c.l.b16 %v33
    %v66 = vunpack.c.l.b16 %v34
    %v67 = vunpack.c.l.b16 %v35
    %v68 = vunpack.c.l.b16 %v36
    %v69 = vunpack.c.l.b16 %v37
    %v70 = vunpack.c.l.b16 %v38
    %v71 = vunpack.c.l.b16 %v39
    %v72 = vpack.c.b16 %v57, %v56
    %v73 = vpack.c.b16 %v59, %v58
    %v74 = vpack.c.b16 %v61, %v60
    %v75 = vpack.c.b16 %v63, %v62
    %v76 = vpack.c.b16 %v65, %v64
    %v77 = vpack.c.b16 %v67, %v66
    %v78 = vpack.c.b16 %v69, %v68
    %v79 = vpack.c.b16 %v71, %v70
    %88 = vmatprep.subr.bf16.mxu0 0
    %89 = vmatpush1.bf16.msra.mxu0 %v79
    %90 = vmatprep.subr.bf16.mxu0 0
    %91 = vmatpush1.bf16.msra.mxu0 %v78
    %92 = vmatprep.subr.bf16.mxu0 0
    %93 = vmatpush1.bf16.msra.mxu0 %v77
    %94 = vmatprep.subr.bf16.mxu0 0
    %95 = vmatpush1.bf16.msra.mxu0 %v76
    %96 = vmatprep.subr.bf16.mxu0 0
    %97 = vmatpush1.bf16.msra.mxu0 %v75
    %98 = vmatprep.subr.bf16.mxu0 0
    %99 = vmatpush1.bf16.msra.mxu0 %v74
    %100 = vmatprep.subr.bf16.mxu0 0
    %101 = vmatpush1.bf16.msra.mxu0 %v73
    %102 = vmatprep.subr.bf16.mxu0 0
    %103 = vmatpush1.bf16.msra.mxu0 %v72
    %104 = vmatprep.subr.bf16.mxu0 0
    %105 = vmatpush2.bf16.msra.mxu0 0
    %106 = vmatprep.subr.bf16.mxu0 0
    %107 = vmatpush2.bf16.msra.mxu0 0
    %108 = vmatprep.subr.bf16.mxu0 0
    %109 = vmatpush2.bf16.msra.mxu0 0
    %110 = vmatprep.subr.bf16.mxu0 0
    %111 = vmatpush2.bf16.msra.mxu0 0
    %112 = vmatprep.subr.bf16.mxu0 0
    %113 = vmatpush2.bf16.msra.mxu0 0
    %114 = vmatprep.subr.bf16.mxu0 0
    %115 = vmatpush2.bf16.msra.mxu0 0
    %116 = vmatprep.subr.bf16.mxu0 0
    %117 = vmatpush2.bf16.msra.mxu0 0
    %118 = vmatprep.subr.bf16.mxu0 0
    %119 = vmatpush2.bf16.msra.mxu0 0
    %120 = vmatprep.mubr.bf16.mxu0 0
    %121 = vmatmul.mubr.bf16.gmra.mxu0 %v23
    %v122 = vpop.f32.mrf.mxu0
    %v123 = vadd.f32 0.0, %v122
    %v124 = vpop.f32.mrf.mxu0
    %v125 = vpop.f32.mrf.mxu0
    %v126 = vpop.f32.mrf.mxu0
    %127 = vdwg.mxu0
    %v128 = vld [vmem:[%s2] sm:$0xf]
    %v129 = vld [vmem:[%s2 + $0x4] sm:$0xf]
    %v130 = vld [vmem:[%s2 + $0x8] sm:$0xf]
    %v131 = vld [vmem:[%s2 + $0xc] sm:$0xf]
    %v132 = vld [vmem:[%s2 + $0x10] sm:$0xf]
    %v133 = vld [vmem:[%s2 + $0x14] sm:$0xf]
    %v134 = vld [vmem:[%s2 + $0x18] sm:$0xf]
    %v135 = vld [vmem:[%s2 + $0x1c] sm:$0xf]
    %v136 = vld [vmem:[%s2 + $0x20] sm:$0xf]
    %v137 = vld [vmem:[%s2 + $0x24] sm:$0xf]
    %v138 = vld [vmem:[%s2 + $0x28] sm:$0xf]
    %v139 = vld [vmem:[%s2 + $0x2c] sm:$0xf]
    %v140 = vld [vmem:[%s2 + $0x30] sm:$0xf]
    %v141 = vld [vmem:[%s2 + $0x34] sm:$0xf]
    %v142 = vld [vmem:[%s2 + $0x38] sm:$0xf]
    %v143 = vld [vmem:[%s2 + $0x3c] sm:$0xf]
    %v160 = vunpack.c.l.b16 %v128
    %v161 = vunpack.c.l.b16 %v129
    %v162 = vunpack.c.l.b16 %v130
    %v163 = vunpack.c.l.b16 %v131
    %v164 = vunpack.c.l.b16 %v132
    %v165 = vunpack.c.l.b16 %v133
    %v166 = vunpack.c.l.b16 %v134
    %v167 = vunpack.c.l.b16 %v135
    %v168 = vunpack.c.l.b16 %v136
    %v169 = vunpack.c.l.b16 %v137
    %v170 = vunpack.c.l.b16 %v138
    %v171 = vunpack.c.l.b16 %v139
    %v172 = vunpack.c.l.b16 %v140
    %v173 = vunpack.c.l.b16 %v141
    %v174 = vunpack.c.l.b16 %v142
    %v175 = vunpack.c.l.b16 %v143
    %v176 = vpack.c.b16 %v161, %v160
    %v177 = vpack.c.b16 %v163, %v162
    %v178 = vpack.c.b16 %v165, %v164
    %v179 = vpack.c.b16 %v167, %v166
    %v180 = vpack.c.b16 %v169, %v168
    %v181 = vpack.c.b16 %v171, %v170
    %v182 = vpack.c.b16 %v173, %v172
    %v183 = vpack.c.b16 %v175, %v174
    %192 = vmatprep.subr.bf16.mxu0 0
    %193 = vmatpush1.bf16.msra.mxu0 %v183
    %194 = vmatprep.subr.bf16.mxu0 0
    %195 = vmatpush1.bf16.msra.mxu0 %v182
    %196 = vmatprep.subr.bf16.mxu0 0
    %197 = vmatpush1.bf16.msra.mxu0 %v181
    %198 = vmatprep.subr.bf16.mxu0 0
    %199 = vmatpush1.bf16.msra.mxu0 %v180
    %200 = vmatprep.subr.bf16.mxu0 0
    %201 = vmatpush1.bf16.msra.mxu0 %v179
    %202 = vmatprep.subr.bf16.mxu0 0
    %203 = vmatpush1.bf16.msra.mxu0 %v178
    %204 = vmatprep.subr.bf16.mxu0 0
    %205 = vmatpush1.bf16.msra.mxu0 %v177
    %206 = vmatprep.subr.bf16.mxu0 0
    %207 = vmatpush1.bf16.msra.mxu0 %v176
    %208 = vmatprep.subr.bf16.mxu0 0
    %209 = vmatpush2.bf16.msra.mxu0 0
    %210 = vmatprep.subr.bf16.mxu0 0
    %211 = vmatpush2.bf16.msra.mxu0 0
    %212 = vmatprep.subr.bf16.mxu0 0
    %213 = vmatpush2.bf16.msra.mxu0 0
    %214 = vmatprep.subr.bf16.mxu0 0
    %215 = vmatpush2.bf16.msra.mxu0 0
    %216 = vmatprep.subr.bf16.mxu0 0
    %217 = vmatpush2.bf16.msra.mxu0 0
    %218 = vmatprep.subr.bf16.mxu0 0
    %219 = vmatpush2.bf16.msra.mxu0 0
    %220 = vmatprep.subr.bf16.mxu0 0
    %221 = vmatpush2.bf16.msra.mxu0 0
    %222 = vmatprep.subr.bf16.mxu0 0
    %223 = vmatpush2.bf16.msra.mxu0 0
    %224 = vmatprep.mubr.bf16.mxu0 0
    %225 = vmatmul.mubr.bf16.gmra.mxu0 %v23
    %v226 = vpop.f32.mrf.mxu0
    %v227 = vadd.f32 0.0, %v226
    %v228 = vpop.f32.mrf.mxu0
    %v229 = vpop.f32.mrf.mxu0
    %v230 = vpop.f32.mrf.mxu0
    %231 = vdwg.mxu0
    %232 = vadd.xlane.f32.xlu0 %v22
    %v233 = vpop.xlane.xlu0 %232
    %v234 = vmul.f32 %v233, 0.0078125
    %v235 = vsub.f32 %v22, %v234
    %v236 = vmul.f32 %v235, %v235
    %237 = vadd.xlane.f32.xlu0 %v236
    %v238 = vpop.xlane.xlu0 %237
    %v239 = vmul.f32 %v238, 0.007874016
    %v240 = vmul.f32 %v239, 0.00015625
    %v241 = vmul.f32 %v123, %v123
    %v242 = vmul.f32 %v227, %v227
    %v243 = vadd.f32 %v241, %v242
    %vm244 = vcmp.gt.f32.partialorder %v243, %v240
    %v245 = vsel %vm244, %v123, 0.0
    %v246 = vsel %vm244, %v227, 0.0
    %v247 = vpack.c.bf16 %v245, %v245
    %v248 = vld [vmem:[%s3] sm:$0xf]
    %v249 = vld [vmem:[%s3 + $0x4] sm:$0xf]
    %v250 = vld [vmem:[%s3 + $0x8] sm:$0xf]
    %v251 = vld [vmem:[%s3 + $0xc] sm:$0xf]
    %v252 = vld [vmem:[%s3 + $0x10] sm:$0xf]
    %v253 = vld [vmem:[%s3 + $0x14] sm:$0xf]
    %v254 = vld [vmem:[%s3 + $0x18] sm:$0xf]
    %v255 = vld [vmem:[%s3 + $0x1c] sm:$0xf]
    %v256 = vld [vmem:[%s3 + $0x20] sm:$0xf]
    %v257 = vpack.c.bf16 %v246, %v246
    %v258 = vld [vmem:[%s4] sm:$0xf]
    %v259 = vld [vmem:[%s4 + $0x4] sm:$0xf]
    %v260 = vld [vmem:[%s4 + $0x8] sm:$0xf]
    %v261 = vld [vmem:[%s4 + $0xc] sm:$0xf]
    %v262 = vld [vmem:[%s4 + $0x10] sm:$0xf]
    %v263 = vld [vmem:[%s4 + $0x14] sm:$0xf]
    %v264 = vld [vmem:[%s4 + $0x18] sm:$0xf]
    %v265 = vld [vmem:[%s4 + $0x1c] sm:$0xf]
    %v266 = vld [vmem:[%s4 + $0x20] sm:$0xf]
    %v276 = vunpack.c.l.b16 %v258
    %v277 = vunpack.c.l.b16 %v259
    %v278 = vunpack.c.l.b16 %v260
    %v279 = vunpack.c.l.b16 %v261
    %v280 = vunpack.c.l.b16 %v262
    %v281 = vunpack.c.l.b16 %v263
    %v282 = vunpack.c.l.b16 %v264
    %v283 = vunpack.c.l.b16 %v265
    %v284 = vunpack.c.l.b16 %v266
    %v285 = vpack.c.b16 %v277, %v276
    %v286 = vpack.c.b16 %v279, %v278
    %v287 = vpack.c.b16 %v281, %v280
    %v288 = vpack.c.b16 %v283, %v282
    %v289 = vpack.c.b16 %v284, %v284
    %vm294 = vcmask 588800
    %v296 = vsel %vm294, %v257, 0
    %vm298 = vcmask 1043456
    %v300 = vsel %vm298, %v289, 0
    %302 = vmatprep.subr.bf16.mxu0 0
    %303 = vmatpush1.bf16.msra.mxu0 0
    %304 = vmatprep.subr.bf16.mxu0 0
    %305 = vmatpush1.bf16.msra.mxu0 0
    %306 = vmatprep.subr.bf16.mxu0 0
    %307 = vmatpush1.bf16.msra.mxu0 0
    %308 = vmatprep.subr.bf16.mxu0 0
    %309 = vmatpush1.bf16.msra.mxu0 %v300
    %310 = vmatprep.subr.bf16.mxu0 0
    %311 = vmatpush1.bf16.msra.mxu0 %v288
    %312 = vmatprep.subr.bf16.mxu0 0
    %313 = vmatpush1.bf16.msra.mxu0 %v287
    %314 = vmatprep.subr.bf16.mxu0 0
    %315 = vmatpush1.bf16.msra.mxu0 %v286
    %316 = vmatprep.subr.bf16.mxu0 0
    %317 = vmatpush1.bf16.msra.mxu0 %v285
    %318 = vmatprep.subr.bf16.mxu0 0
    %319 = vmatpush2.bf16.msra.mxu0 0
    %320 = vmatprep.subr.bf16.mxu0 0
    %321 = vmatpush2.bf16.msra.mxu0 0
    %322 = vmatprep.subr.bf16.mxu0 0
    %323 = vmatpush2.bf16.msra.mxu0 0
    %324 = vmatprep.subr.bf16.mxu0 0
    %325 = vmatpush2.bf16.msra.mxu0 0
    %326 = vmatprep.subr.bf16.mxu0 0
    %327 = vmatpush2.bf16.msra.mxu0 0
    %328 = vmatprep.subr.bf16.mxu0 0
    %329 = vmatpush2.bf16.msra.mxu0 0
    %330 = vmatprep.subr.bf16.mxu0 0
    %331 = vmatpush2.bf16.msra.mxu0 0
    %332 = vmatprep.subr.bf16.mxu0 0
    %333 = vmatpush2.bf16.msra.mxu0 0
    %334 = vmatprep.mubr.bf16.mxu0 0
    %335 = vmatmul.mubr.bf16.gmra.mxu0 %v296
    %v336 = vpop.f32.mrf.mxu0
    %v337 = vadd.f32 0.0, %v336
    %v338 = vpop.f32.mrf.mxu0
    %v339 = vpop.f32.mrf.mxu0
    %v340 = vpop.f32.mrf.mxu0
    %341 = vdwg.mxu0
    %v351 = vunpack.c.l.b16 %v248
    %v352 = vunpack.c.l.b16 %v249
    %v353 = vunpack.c.l.b16 %v250
    %v354 = vunpack.c.l.b16 %v251
    %v355 = vunpack.c.l.b16 %v252
    %v356 = vunpack.c.l.b16 %v253
    %v357 = vunpack.c.l.b16 %v254
    %v358 = vunpack.c.l.b16 %v255
    %v359 = vunpack.c.l.b16 %v256
    %v360 = vpack.c.b16 %v352, %v351
    %v361 = vpack.c.b16 %v354, %v353
    %v362 = vpack.c.b16 %v356, %v355
    %v363 = vpack.c.b16 %v358, %v357
    %v364 = vpack.c.b16 %v359, %v359
    %v370 = vsel %vm294, %v247, 0
    %v373 = vsel %vm298, %v364, 0
    %375 = vmatprep.subr.bf16.mxu0 0
    %376 = vmatpush1.bf16.msra.mxu0 0
    %377 = vmatprep.subr.bf16.mxu0 0
    %378 = vmatpush1.bf16.msra.mxu0 0
    %379 = vmatprep.subr.bf16.mxu0 0
    %380 = vmatpush1.bf16.msra.mxu0 0
    %381 = vmatprep.subr.bf16.mxu0 0
    %382 = vmatpush1.bf16.msra.mxu0 %v373
    %383 = vmatprep.subr.bf16.mxu0 0
    %384 = vmatpush1.bf16.msra.mxu0 %v363
    %385 = vmatprep.subr.bf16.mxu0 0
    %386 = vmatpush1.bf16.msra.mxu0 %v362
    %387 = vmatprep.subr.bf16.mxu0 0
    %388 = vmatpush1.bf16.msra.mxu0 %v361
    %389 = vmatprep.subr.bf16.mxu0 0
    %390 = vmatpush1.bf16.msra.mxu0 %v360
    %391 = vmatprep.subr.bf16.mxu0 0
    %392 = vmatpush2.bf16.msra.mxu0 0
    %393 = vmatprep.subr.bf16.mxu0 0
    %394 = vmatpush2.bf16.msra.mxu0 0
    %395 = vmatprep.subr.bf16.mxu0 0
    %396 = vmatpush2.bf16.msra.mxu0 0
    %397 = vmatprep.subr.bf16.mxu0 0
    %398 = vmatpush2.bf16.msra.mxu0 0
    %399 = vmatprep.subr.bf16.mxu0 0
    %400 = vmatpush2.bf16.msra.mxu0 0
    %401 = vmatprep.subr.bf16.mxu0 0
    %402 = vmatpush2.bf16.msra.mxu0 0
    %403 = vmatprep.subr.bf16.mxu0 0
    %404 = vmatpush2.bf16.msra.mxu0 0
    %405 = vmatprep.subr.bf16.mxu0 0
    %406 = vmatpush2.bf16.msra.mxu0 0
    %407 = vmatprep.mubr.bf16.mxu0 0
    %408 = vmatmul.mubr.bf16.gmra.mxu0 %v370
    %v409 = vpop.f32.mrf.mxu0
    %v410 = vadd.f32 %v337, %v409
    %v411 = vpop.f32.mrf.mxu0
    %v412 = vpop.f32.mrf.mxu0
    %v413 = vpop.f32.mrf.mxu0
    %414 = vdwg.mxu0
    %415 = vst [vmem:[#allocation2] sm:$0xff] %v410
    // Predicated region
    $region22: #{tpu_custom_call.1} parent=1 // pred_check
      _
    $region23: #{tpu_custom_call.1} parent=1 // pred_check_branch
      %417 = sbr.rel (0) target = $region25
    $region24: #{tpu_custom_call.1} parent=1 // pred_region
      %s419 = ssub.s32 128, 128
      %420 = vsyncadd [#allocation3], %s419
      %s422 = sshll.u32 [#allocation2], 4
      %s423 = int_to_ptr.vmem [resolvable:$true] %s422
      %425 = dma.vmem_to_hbm [thread:$0]  %s423, 128, %s5, [#allocation3]
    $region25: #{tpu_custom_call.1} parent=1 // pred_fallthru
      _
    // Predicated region
    $region26: #{tpu_custom_call.1} parent=1 // pred_check
      _
    $region27: #{tpu_custom_call.1} parent=1 // pred_check_branch
      %427 = sbr.rel (0) target = $region29
    $region28: #{tpu_custom_call.1} parent=1 // pred_region
      %428 = dma.done [#allocation3], 128
    $region29: #{tpu_custom_call.1} parent=1 // pred_fallthru
      _
    %429 = vsyncpa [#allocation3], 1

</llo_original>
